<compile_context>
chip_gen: v5e
topology: v5e:2x2
jax: 0.10.0
libtpu: 0.0.40
codegen_flags: <defaults>
</compile_context>

<pallas_src>
import jax
import jax.numpy as jnp
from jax.experimental import pallas as pl
from jax.experimental.pallas import tpu as pltpu

_C1 = 0.01 ** 2
_C2 = 0.03 ** 2


def ssim_kernel(xp_ref, yp_ref, o_ref):
    # xp_ref / yp_ref: (nt, H+2, W+2) reflection-padded planes (with halo)
    # o_ref:           (nt, H, W) SSIM loss map for the same planes
    xp = xp_ref[...].astype(jnp.float32)
    yp = yp_ref[...].astype(jnp.float32)

    nt, hp, wp = xp.shape
    h, w = hp - 2, wp - 2

    def pool3x3(a):
        # Separable 3x3 mean, stride 1, VALID on the padded plane -> (nt,h,w).
        # Lane-axis shifts first (XLU), then sublane-axis shifts.
        col = a[:, :, 0:w] + a[:, :, 1:w + 1] + a[:, :, 2:w + 2]
        row = col[:, 0:h, :] + col[:, 1:h + 1, :] + col[:, 2:h + 2, :]
        return row * (1.0 / 9.0)

    mu_x = pool3x3(xp)
    mu_y = pool3x3(yp)
    sigma_x = pool3x3(xp * xp) - mu_x * mu_x
    sigma_y = pool3x3(yp * yp) - mu_y * mu_y
    sigma_xy = pool3x3(xp * yp) - mu_x * mu_y

    ssim_n = (2.0 * mu_x * mu_y + _C1) * (2.0 * sigma_xy + _C2)
    ssim_d = (mu_x * mu_x + mu_y * mu_y + _C1) * (sigma_x + sigma_y + _C2)

    out = jnp.clip((1.0 - ssim_n / ssim_d) * 0.5, 0.0, 1.0)
    o_ref[...] = out.astype(o_ref.dtype)


def _pick_plane_block(n_planes, plane_f32_bytes, target_bytes=1 << 20):
    """Largest divisor of n_planes whose per-input f32 tile is ~target_bytes."""
    nt = max(1, int(target_bytes // max(plane_f32_bytes, 1)))
    if n_planes >= 4:
        nt = min(nt, n_planes // 2)   # keep >= 2 grid steps (megacore / overlap)
    nt = min(nt, n_planes)
    while n_planes % nt:
        nt -= 1
    return nt


def ssim(x, y):
    """x, y: (B, C, H, W). Returns the per-pixel SSIM loss map (B, C, H, W)."""
    assert x.shape == y.shape
    B, C, H, W = x.shape
    Hp, Wp = H + 2, W + 2

    # Reflection pad (halo prep) in the wrapper — same semantics as
    # nn.ReflectionPad2d(1).
    pad = lambda a: jnp.pad(a, ((0, 0), (0, 0), (1, 1), (1, 1)), mode="reflect")
    xp = pad(x).reshape(B * C, Hp, Wp)
    yp = pad(y).reshape(B * C, Hp, Wp)

    n_planes = B * C
    # Budget on f32 bytes: in-kernel stats are f32 even for bf16 inputs.
    plane_f32_bytes = Hp * Wp * 4
    nt = _pick_plane_block(n_planes, plane_f32_bytes)
    n_steps = n_planes // nt

    out = pl.pallas_call(
        ssim_kernel,
        out_shape=jax.ShapeDtypeStruct((n_planes, H, W), x.dtype),
        grid_spec=pltpu.PrefetchScalarGridSpec(
            num_scalar_prefetch=0,
            grid=(n_steps,),
            in_specs=[
                pl.BlockSpec((nt, Hp, Wp), lambda i: (i, 0, 0)),
                pl.BlockSpec((nt, Hp, Wp), lambda i: (i, 0, 0)),
            ],
            out_specs=pl.BlockSpec((nt, H, W), lambda i: (i, 0, 0)),
        ),
        compiler_params=pltpu.CompilerParams(
            dimension_semantics=("parallel",),
            vmem_limit_bytes=32 << 20,
        ),
    )(xp, yp)

    return out.reshape(B, C, H, W)


def reference(x, y):
    """Pure-JAX reference matching the PyTorch SSIM module."""
    pad = lambda a: jnp.pad(a, ((0, 0), (0, 0), (1, 1), (1, 1)), mode="reflect")
    xp = pad(x.astype(jnp.float32))
    yp = pad(y.astype(jnp.float32))

    def pool(a):
        s = jax.lax.reduce_window(a, 0.0, jax.lax.add,
                                  (1, 1, 3, 3), (1, 1, 1, 1), "VALID")
        return s / 9.0

    mu_x = pool(xp)
    mu_y = pool(yp)
    sigma_x = pool(xp * xp) - mu_x ** 2
    sigma_y = pool(yp * yp) - mu_y ** 2
    sigma_xy = pool(xp * yp) - mu_x * mu_y

    n = (2.0 * mu_x * mu_y + _C1) * (2.0 * sigma_xy + _C2)
    d = (mu_x ** 2 + mu_y ** 2 + _C1) * (sigma_x + sigma_y + _C2)
    return jnp.clip((1.0 - n / d) * 0.5, 0.0, 1.0).astype(x.dtype)


if __name__ == "__main__":
    B, C, H, W = 2, 4, 16, 16

    key = jax.random.PRNGKey(0)
    kx, ky = jax.random.split(key, 2)
    x = jax.random.uniform(kx, (B, C, H, W), dtype=jnp.float32)
    y = jax.random.uniform(ky, (B, C, H, W), dtype=jnp.float32)

    out = ssim(x, y)
    out = jax.block_until_ready(out)

    ref = reference(x, y)
    assert out.shape == (B, C, H, W)
    assert jnp.allclose(out, ref, atol=1e-5, rtol=1e-5), (
        float(jnp.max(jnp.abs(out - ref))))

    print("KERNEL_OK")
</pallas_src>

<mosaic_0001>
module attributes {stable_mosaic.version = 11 : i64} {
  func.func @ssim_kernel(%arg0: i32, %arg1: memref<4x18x18xf32, #tpu.memory_space<vmem>>, %arg2: memref<4x18x18xf32, #tpu.memory_space<vmem>>, %arg3: memref<4x16x16xf32, #tpu.memory_space<vmem>>) attributes {dimension_semantics = [#tpu.dimension_semantics<parallel>], iteration_bounds = array<i64: 2>, scalar_prefetch = 0 : i64, scratch_operands = 0 : i64, tpu.core_type = #tpu.core_type<tc>, window_params = [{transform_indices = @transform_0, window_bounds = array<i64: 4, 18, 18>}, {transform_indices = @transform_1, window_bounds = array<i64: 4, 18, 18>}, {transform_indices = @transform_2, window_bounds = array<i64: 4, 16, 16>}]} {
    %c0 = arith.constant 0 : index
    %c0_0 = arith.constant 0 : index
    %c0_1 = arith.constant 0 : index
    %0 = vector.load %arg1[%c0, %c0_0, %c0_1] : memref<4x18x18xf32, #tpu.memory_space<vmem>>, vector<4x18x18xf32>
    %c0_2 = arith.constant 0 : index
    %c0_3 = arith.constant 0 : index
    %c0_4 = arith.constant 0 : index
    %1 = vector.load %arg2[%c0_2, %c0_3, %c0_4] : memref<4x18x18xf32, #tpu.memory_space<vmem>>, vector<4x18x18xf32>
    %2 = vector.extract_strided_slice %0 {offsets = [0, 0, 0], sizes = [4, 18, 16], strides = [1, 1, 1]} : vector<4x18x18xf32> to vector<4x18x16xf32>
    %3 = vector.extract_strided_slice %0 {offsets = [0, 0, 1], sizes = [4, 18, 16], strides = [1, 1, 1]} : vector<4x18x18xf32> to vector<4x18x16xf32>
    %4 = arith.addf %2, %3 : vector<4x18x16xf32>
    %5 = vector.extract_strided_slice %0 {offsets = [0, 0, 2], sizes = [4, 18, 16], strides = [1, 1, 1]} : vector<4x18x18xf32> to vector<4x18x16xf32>
    %6 = arith.addf %4, %5 : vector<4x18x16xf32>
    %7 = vector.extract_strided_slice %6 {offsets = [0, 0, 0], sizes = [4, 16, 16], strides = [1, 1, 1]} : vector<4x18x16xf32> to vector<4x16x16xf32>
    %8 = vector.extract_strided_slice %6 {offsets = [0, 1, 0], sizes = [4, 16, 16], strides = [1, 1, 1]} : vector<4x18x16xf32> to vector<4x16x16xf32>
    %9 = arith.addf %7, %8 : vector<4x16x16xf32>
    %10 = vector.extract_strided_slice %6 {offsets = [0, 2, 0], sizes = [4, 16, 16], strides = [1, 1, 1]} : vector<4x18x16xf32> to vector<4x16x16xf32>
    %11 = arith.addf %9, %10 : vector<4x16x16xf32>
    %cst = arith.constant 0.111111112 : f32
    %12 = vector.broadcast %cst : f32 to vector<4x16x16xf32>
    %13 = arith.mulf %11, %12 : vector<4x16x16xf32>
    %14 = vector.extract_strided_slice %1 {offsets = [0, 0, 0], sizes = [4, 18, 16], strides = [1, 1, 1]} : vector<4x18x18xf32> to vector<4x18x16xf32>
    %15 = vector.extract_strided_slice %1 {offsets = [0, 0, 1], sizes = [4, 18, 16], strides = [1, 1, 1]} : vector<4x18x18xf32> to vector<4x18x16xf32>
    %16 = arith.addf %14, %15 : vector<4x18x16xf32>
    %17 = vector.extract_strided_slice %1 {offsets = [0, 0, 2], sizes = [4, 18, 16], strides = [1, 1, 1]} : vector<4x18x18xf32> to vector<4x18x16xf32>
    %18 = arith.addf %16, %17 : vector<4x18x16xf32>
    %19 = vector.extract_strided_slice %18 {offsets = [0, 0, 0], sizes = [4, 16, 16], strides = [1, 1, 1]} : vector<4x18x16xf32> to vector<4x16x16xf32>
    %20 = vector.extract_strided_slice %18 {offsets = [0, 1, 0], sizes = [4, 16, 16], strides = [1, 1, 1]} : vector<4x18x16xf32> to vector<4x16x16xf32>
    %21 = arith.addf %19, %20 : vector<4x16x16xf32>
    %22 = vector.extract_strided_slice %18 {offsets = [0, 2, 0], sizes = [4, 16, 16], strides = [1, 1, 1]} : vector<4x18x16xf32> to vector<4x16x16xf32>
    %23 = arith.addf %21, %22 : vector<4x16x16xf32>
    %cst_5 = arith.constant 0.111111112 : f32
    %24 = vector.broadcast %cst_5 : f32 to vector<4x16x16xf32>
    %25 = arith.mulf %23, %24 : vector<4x16x16xf32>
    %26 = arith.mulf %0, %0 : vector<4x18x18xf32>
    %27 = vector.extract_strided_slice %26 {offsets = [0, 0, 0], sizes = [4, 18, 16], strides = [1, 1, 1]} : vector<4x18x18xf32> to vector<4x18x16xf32>
    %28 = vector.extract_strided_slice %26 {offsets = [0, 0, 1], sizes = [4, 18, 16], strides = [1, 1, 1]} : vector<4x18x18xf32> to vector<4x18x16xf32>
    %29 = arith.addf %27, %28 : vector<4x18x16xf32>
    %30 = vector.extract_strided_slice %26 {offsets = [0, 0, 2], sizes = [4, 18, 16], strides = [1, 1, 1]} : vector<4x18x18xf32> to vector<4x18x16xf32>
    %31 = arith.addf %29, %30 : vector<4x18x16xf32>
    %32 = vector.extract_strided_slice %31 {offsets = [0, 0, 0], sizes = [4, 16, 16], strides = [1, 1, 1]} : vector<4x18x16xf32> to vector<4x16x16xf32>
    %33 = vector.extract_strided_slice %31 {offsets = [0, 1, 0], sizes = [4, 16, 16], strides = [1, 1, 1]} : vector<4x18x16xf32> to vector<4x16x16xf32>
    %34 = arith.addf %32, %33 : vector<4x16x16xf32>
    %35 = vector.extract_strided_slice %31 {offsets = [0, 2, 0], sizes = [4, 16, 16], strides = [1, 1, 1]} : vector<4x18x16xf32> to vector<4x16x16xf32>
    %36 = arith.addf %34, %35 : vector<4x16x16xf32>
    %cst_6 = arith.constant 0.111111112 : f32
    %37 = vector.broadcast %cst_6 : f32 to vector<4x16x16xf32>
    %38 = arith.mulf %36, %37 : vector<4x16x16xf32>
    %39 = arith.mulf %13, %13 : vector<4x16x16xf32>
    %40 = arith.subf %38, %39 : vector<4x16x16xf32>
    %41 = arith.mulf %1, %1 : vector<4x18x18xf32>
    %42 = vector.extract_strided_slice %41 {offsets = [0, 0, 0], sizes = [4, 18, 16], strides = [1, 1, 1]} : vector<4x18x18xf32> to vector<4x18x16xf32>
    %43 = vector.extract_strided_slice %41 {offsets = [0, 0, 1], sizes = [4, 18, 16], strides = [1, 1, 1]} : vector<4x18x18xf32> to vector<4x18x16xf32>
    %44 = arith.addf %42, %43 : vector<4x18x16xf32>
    %45 = vector.extract_strided_slice %41 {offsets = [0, 0, 2], sizes = [4, 18, 16], strides = [1, 1, 1]} : vector<4x18x18xf32> to vector<4x18x16xf32>
    %46 = arith.addf %44, %45 : vector<4x18x16xf32>
    %47 = vector.extract_strided_slice %46 {offsets = [0, 0, 0], sizes = [4, 16, 16], strides = [1, 1, 1]} : vector<4x18x16xf32> to vector<4x16x16xf32>
    %48 = vector.extract_strided_slice %46 {offsets = [0, 1, 0], sizes = [4, 16, 16], strides = [1, 1, 1]} : vector<4x18x16xf32> to vector<4x16x16xf32>
    %49 = arith.addf %47, %48 : vector<4x16x16xf32>
    %50 = vector.extract_strided_slice %46 {offsets = [0, 2, 0], sizes = [4, 16, 16], strides = [1, 1, 1]} : vector<4x18x16xf32> to vector<4x16x16xf32>
    %51 = arith.addf %49, %50 : vector<4x16x16xf32>
    %cst_7 = arith.constant 0.111111112 : f32
    %52 = vector.broadcast %cst_7 : f32 to vector<4x16x16xf32>
    %53 = arith.mulf %51, %52 : vector<4x16x16xf32>
    %54 = arith.mulf %25, %25 : vector<4x16x16xf32>
    %55 = arith.subf %53, %54 : vector<4x16x16xf32>
    %56 = arith.mulf %0, %1 : vector<4x18x18xf32>
    %57 = vector.extract_strided_slice %56 {offsets = [0, 0, 0], sizes = [4, 18, 16], strides = [1, 1, 1]} : vector<4x18x18xf32> to vector<4x18x16xf32>
    %58 = vector.extract_strided_slice %56 {offsets = [0, 0, 1], sizes = [4, 18, 16], strides = [1, 1, 1]} : vector<4x18x18xf32> to vector<4x18x16xf32>
    %59 = arith.addf %57, %58 : vector<4x18x16xf32>
    %60 = vector.extract_strided_slice %56 {offsets = [0, 0, 2], sizes = [4, 18, 16], strides = [1, 1, 1]} : vector<4x18x18xf32> to vector<4x18x16xf32>
    %61 = arith.addf %59, %60 : vector<4x18x16xf32>
    %62 = vector.extract_strided_slice %61 {offsets = [0, 0, 0], sizes = [4, 16, 16], strides = [1, 1, 1]} : vector<4x18x16xf32> to vector<4x16x16xf32>
    %63 = vector.extract_strided_slice %61 {offsets = [0, 1, 0], sizes = [4, 16, 16], strides = [1, 1, 1]} : vector<4x18x16xf32> to vector<4x16x16xf32>
    %64 = arith.addf %62, %63 : vector<4x16x16xf32>
    %65 = vector.extract_strided_slice %61 {offsets = [0, 2, 0], sizes = [4, 16, 16], strides = [1, 1, 1]} : vector<4x18x16xf32> to vector<4x16x16xf32>
    %66 = arith.addf %64, %65 : vector<4x16x16xf32>
    %cst_8 = arith.constant 0.111111112 : f32
    %67 = vector.broadcast %cst_8 : f32 to vector<4x16x16xf32>
    %68 = arith.mulf %66, %67 : vector<4x16x16xf32>
    %69 = arith.mulf %13, %25 : vector<4x16x16xf32>
    %70 = arith.subf %68, %69 : vector<4x16x16xf32>
    %cst_9 = arith.constant 2.000000e+00 : f32
    %71 = vector.broadcast %cst_9 : f32 to vector<4x16x16xf32>
    %72 = arith.mulf %71, %13 : vector<4x16x16xf32>
    %73 = arith.mulf %72, %25 : vector<4x16x16xf32>
    %cst_10 = arith.constant 9.99999974E-5 : f32
    %74 = vector.broadcast %cst_10 : f32 to vector<4x16x16xf32>
    %75 = arith.addf %73, %74 : vector<4x16x16xf32>
    %cst_11 = arith.constant 2.000000e+00 : f32
    %76 = vector.broadcast %cst_11 : f32 to vector<4x16x16xf32>
    %77 = arith.mulf %76, %70 : vector<4x16x16xf32>
    %cst_12 = arith.constant 8.99999984E-4 : f32
    %78 = vector.broadcast %cst_12 : f32 to vector<4x16x16xf32>
    %79 = arith.addf %77, %78 : vector<4x16x16xf32>
    %80 = arith.mulf %75, %79 : vector<4x16x16xf32>
    %81 = arith.mulf %13, %13 : vector<4x16x16xf32>
    %82 = arith.mulf %25, %25 : vector<4x16x16xf32>
    %83 = arith.addf %81, %82 : vector<4x16x16xf32>
    %cst_13 = arith.constant 9.99999974E-5 : f32
    %84 = vector.broadcast %cst_13 : f32 to vector<4x16x16xf32>
    %85 = arith.addf %83, %84 : vector<4x16x16xf32>
    %86 = arith.addf %40, %55 : vector<4x16x16xf32>
    %cst_14 = arith.constant 8.99999984E-4 : f32
    %87 = vector.broadcast %cst_14 : f32 to vector<4x16x16xf32>
    %88 = arith.addf %86, %87 : vector<4x16x16xf32>
    %89 = arith.mulf %85, %88 : vector<4x16x16xf32>
    %90 = arith.divf %80, %89 : vector<4x16x16xf32>
    %cst_15 = arith.constant 1.000000e+00 : f32
    %91 = vector.broadcast %cst_15 : f32 to vector<4x16x16xf32>
    %92 = arith.subf %91, %90 : vector<4x16x16xf32>
    %cst_16 = arith.constant 5.000000e-01 : f32
    %93 = vector.broadcast %cst_16 : f32 to vector<4x16x16xf32>
    %94 = arith.mulf %92, %93 : vector<4x16x16xf32>
    %cst_17 = arith.constant 0.000000e+00 : f32
    %cst_18 = arith.constant 1.000000e+00 : f32
    %95 = vector.broadcast %cst_17 : f32 to vector<4x16x16xf32>
    %96 = arith.maximumf %95, %94 : vector<4x16x16xf32>
    %97 = vector.broadcast %cst_18 : f32 to vector<4x16x16xf32>
    %98 = arith.minimumf %97, %96 : vector<4x16x16xf32>
    %c0_19 = arith.constant 0 : index
    %c0_20 = arith.constant 0 : index
    %c0_21 = arith.constant 0 : index
    %99 = vector.load %arg3[%c0_19, %c0_20, %c0_21] : memref<4x16x16xf32, #tpu.memory_space<vmem>>, vector<4x16x16xf32>
    tpu.vector_store %arg3[%c0_19, %c0_20, %c0_21], %98 {strides = array<i32>} : memref<4x16x16xf32, #tpu.memory_space<vmem>>, vector<4x16x16xf32>,
    return
  }
  func.func @transform_0(%arg0: i32) -> (i32, i32, i32) {
    %c0_i32 = arith.constant 0 : i32
    %c0_i32_0 = arith.constant 0 : i32
    %c0_i32_1 = arith.constant 0 : i32
    return %arg0, %c0_i32, %c0_i32_0 : i32, i32, i32
  }
  func.func @transform_1(%arg0: i32) -> (i32, i32, i32) {
    %c0_i32 = arith.constant 0 : i32
    %c0_i32_0 = arith.constant 0 : i32
    %c0_i32_1 = arith.constant 0 : i32
    return %arg0, %c0_i32, %c0_i32_0 : i32, i32, i32
  }
  func.func @transform_2(%arg0: i32) -> (i32, i32, i32) {
    %c0_i32 = arith.constant 0 : i32
    %c0_i32_0 = arith.constant 0 : i32
    %c0_i32_1 = arith.constant 0 : i32
    return %arg0, %c0_i32, %c0_i32_0 : i32, i32, i32
  }
}

</mosaic_0001>

<llo_original>
// kernel: tpu_custom_call.1
$region0: #{tpu_custom_call.1}
  #allocation0 [shape = 'u32[]', space=smem, size = 0x4, offset = 0x4, fixed_abs, tag = 'smem constant byte address 0x4 - core index']
  #allocation1 [shape = 'u32[72,128]{1,0:T(1,128)}', space=vmem, size = 0x9000, scoped, tag = 'internal scratch']
  %s0 = inlined_call_operand.vmem [shape: f32[8,18,18], index: 0, kind: input, shape index: {}]
  %s1 = inlined_call_operand.vmem [shape: f32[8,18,18], index: 1, kind: input, shape index: {}]
  %s2 = inlined_call_operand.hbm [shape: f32[8,16,16], index: 2, kind: output, shape index: {}]
  %s3 = sld [smem:[#allocation0]]
  $region41: #{tpu_custom_call.1} parent=0
    _
  %s5 = ssub.s32 1, %s3
  %s6 = scalar_select 0, %s5, %s3
  $region1: #{tpu_custom_call.1} parent=0
    #allocation2 [shape = 'u8[65536]{0}', space=vmem, size = 0x10000, scoped, tag = 'output window, operand 0']
    #allocation3 [shape = 's32[2]{0}', space=sflag, size = 0x8, scoped, tag = 'scoped memory for tpu_custom_call.1']
    %7 = vsyncpa [#allocation3], 0
    %s8 = scalar_lea.sflag [#allocation3], 1
    %9 = vsyncpa %s8, 0
    loop: start=0, step=1, limit=4
    $region2: #{tpu_custom_call.1} parent=1 // loop_pre_header
      _
    $region3: #{tpu_custom_call.1} parent=1 // loop_header
      %s11 = sphi 0, %s15
      %p12 = scmp.ge.s32.totalorder %s11, 4
      %s21 = sphi 0, %s23
      %s24 = sphi 0, %s21
      %s25 = sphi 0, %s24
      %s41 = sphi 0, %s25
      %s47 = sphi 0, %s49
      %s50 = sphi 0, %s47
      %s51 = sphi 0, %s50
      %s67 = sphi 0, %s51
      %s73 = sphi 0, %s75
      %s76 = sphi 0, %s73
      %s77 = sphi 0, %s76
      %s93 = sphi 0, %s77
    $region4: #{tpu_custom_call.1} parent=1 // loop_header_branch
      %14 = sbr.rel (%p12) target = $region8
    $region5: #{tpu_custom_call.1} parent=1 // loop_body
      %s16 = ssub.s32 %s11, 1
      %s17 = ssub.s32 %s11, 2
      %s18 = sadd.s32 %s11, 1
      %s19 = ssub.s32 %s11, %s18
      %p20 = scmp.eq.s32.totalorder %s19, 0
      %s22 = sadd.s32 %s21, 1
      %s23 = scalar_select %p20, %s21, %s22
      %p26 = pneg %p20
      %p27 = scmp.eq.s32.totalorder %s11, 1
      %p28 = por %p26, %p27
      %p29 = scmp.ne.s32.totalorder %s21, %s24
      %p30 = scmp.eq.s32.totalorder %s11, 0
      %p31 = por %p29, %p30
      %p32 = scmp.ne.s32.totalorder %s21, %s24
      %p33 = scmp.eq.s32.totalorder %s16, 1
      %p34 = por %p32, %p33
      %p35 = scmp.ne.s32.totalorder %s24, %s25
      %p36 = scmp.eq.s32.totalorder %s16, 0
      %p37 = por %p35, %p36
      %p38 = scmp.ne.s32.totalorder %s24, %s25
      %p39 = scmp.eq.s32.totalorder %s17, 1
      %p40 = por %p38, %p39
      %p42 = scmp.ne.s32.totalorder %s25, %s41
      %p43 = scmp.eq.s32.totalorder %s17, 0
      %p44 = por %p42, %p43
      %s45 = ssub.s32 %s11, %s18
      %p46 = scmp.eq.s32.totalorder %s45, 0
      %s48 = sadd.s32 %s47, 1
      %s49 = scalar_select %p46, %s47, %s48
      %p52 = pneg %p46
      %p53 = scmp.eq.s32.totalorder %s11, 1
      %p54 = por %p52, %p53
      %p55 = scmp.ne.s32.totalorder %s47, %s50
      %p56 = scmp.eq.s32.totalorder %s11, 0
      %p57 = por %p55, %p56
      %p58 = scmp.ne.s32.totalorder %s47, %s50
      %p59 = scmp.eq.s32.totalorder %s16, 1
      %p60 = por %p58, %p59
      %p61 = scmp.ne.s32.totalorder %s50, %s51
      %p62 = scmp.eq.s32.totalorder %s16, 0
      %p63 = por %p61, %p62
      %p64 = scmp.ne.s32.totalorder %s50, %s51
      %p65 = scmp.eq.s32.totalorder %s17, 1
      %p66 = por %p64, %p65
      %p68 = scmp.ne.s32.totalorder %s51, %s67
      %p69 = scmp.eq.s32.totalorder %s17, 0
      %p70 = por %p68, %p69
      %s71 = ssub.s32 %s11, %s18
      %p72 = scmp.eq.s32.totalorder %s71, 0
      %s74 = sadd.s32 %s73, 1
      %s75 = scalar_select %p72, %s73, %s74
      %p78 = pneg %p72
      %p79 = scmp.eq.s32.totalorder %s11, 1
      %p80 = por %p78, %p79
      %p81 = scmp.ne.s32.totalorder %s73, %s76
      %p82 = scmp.eq.s32.totalorder %s11, 0
      %p83 = por %p81, %p82
      %p84 = scmp.ne.s32.totalorder %s73, %s76
      %p85 = scmp.eq.s32.totalorder %s16, 1
      %p86 = por %p84, %p85
      %p87 = scmp.ne.s32.totalorder %s76, %s77
      %p88 = scmp.eq.s32.totalorder %s16, 0
      %p89 = por %p87, %p88
      %p90 = scmp.ne.s32.totalorder %s76, %s77
      %p91 = scmp.eq.s32.totalorder %s17, 1
      %p92 = por %p90, %p91
      %p94 = scmp.ne.s32.totalorder %s77, %s93
      %p95 = scmp.eq.s32.totalorder %s17, 0
      %p96 = por %p94, %p95
      %p97 = scmp.le.s32.totalorder 1, %s11
      %p98 = scmp.lt.s32.totalorder %s11, 3
      %p99 = pnand %p97, %p98
      %p100 = pneg %p99
      // Predicated region
      $region9: #{tpu_custom_call.1} parent=5 // pred_check
        _
      $region10: #{tpu_custom_call.1} parent=5 // pred_check_branch
        %102 = sbr.rel (%p99) target = $region12
      $region11: #{tpu_custom_call.1} parent=5 // pred_region
        %s103 = ssub.s32 %s11, 1
      $region12: #{tpu_custom_call.1} parent=5 // pred_fallthru
        _
      %p104 = scmp.lt.s32.totalorder %s11, 2
      // Predicated region
      $region13: #{tpu_custom_call.1} parent=5 // pred_check
        %p105 = pneg %p104
      $region14: #{tpu_custom_call.1} parent=5 // pred_check_branch
        %107 = sbr.rel (%p105) target = $region16
      $region15: #{tpu_custom_call.1} parent=5 // pred_region
        // Predicated region
        $region17: #{tpu_custom_call.1} parent=15 // pred_check
          %p108 = pneg %p31
        $region18: #{tpu_custom_call.1} parent=15 // pred_check_branch
          %110 = sbr.rel (%p108) target = $region20
        $region19: #{tpu_custom_call.1} parent=15 // pred_region
          %s111 = smul.u32 4, %s11
          %p112 = scmp.lt.s32.totalorder %s111, 7
          %s113 = scalar_select %p112, %s111, 7
          %s114 = smul.addr %s113, 3
          %s115 = smul.addr %s114, 8
          %s116 = scalar_lea.vmem %s0, %s115
          %s117 = smul.u32 4, %s11
        $region20: #{tpu_custom_call.1} parent=15 // pred_fallthru
          _
        // Predicated region
        $region21: #{tpu_custom_call.1} parent=15 // pred_check
          %p118 = pneg %p57
        $region22: #{tpu_custom_call.1} parent=15 // pred_check_branch
          %120 = sbr.rel (%p118) target = $region24
        $region23: #{tpu_custom_call.1} parent=15 // pred_region
          %s121 = smul.u32 4, %s11
          %p122 = scmp.lt.s32.totalorder %s121, 7
          %s123 = scalar_select %p122, %s121, 7
          %s124 = smul.addr %s123, 3
          %s125 = smul.addr %s124, 8
          %s126 = scalar_lea.vmem %s1, %s125
          %s127 = smul.u32 4, %s11
        $region24: #{tpu_custom_call.1} parent=15 // pred_fallthru
          _
      $region16: #{tpu_custom_call.1} parent=5 // pred_fallthru
        _
      %p128 = scmp.le.s32.totalorder 1, %s11
      %p129 = scmp.lt.s32.totalorder %s11, 3
      %p130 = pnand %p128, %p129
      %p131 = pneg %p130
      // Predicated region
      $region25: #{tpu_custom_call.1} parent=5 // pred_check
        _
      $region26: #{tpu_custom_call.1} parent=5 // pred_check_branch
        %133 = sbr.rel (%p130) target = $region28
      $region27: #{tpu_custom_call.1} parent=5 // pred_region
        %s134 = ssub.s32 %s11, 1
        %s135 = smul.u32 4, %s16
        %p136 = scmp.lt.s32.totalorder %s135, 7
        %s137 = scalar_select %p136, %s135, 7
        %s138 = smul.addr %s137, 3
        %s139 = smul.addr %s138, 8
        %s140 = scalar_lea.vmem %s0, %s139
        %p141 = pneg %p37
        %p142 = pneg %p34
        %s143 = smul.u32 4, %s16
        %p144 = scmp.lt.s32.totalorder %s143, 7
        %s145 = scalar_select %p144, %s143, 7
        %s146 = smul.addr %s145, 3
        %s147 = smul.addr %s146, 8
        %s148 = scalar_lea.vmem %s1, %s147
        %p149 = pneg %p63
        %p150 = pneg %p60
        %p151 = pneg %p89
        %p152 = pneg %p86
        %s153 = sand.u32 %s76, 1
        %s154 = scalar_lea.sflag [#allocation3], %s153
        %s155 = sand.u32 %s76, 1
        %s156 = smul.addr %s155, 64
        %s157 = scalar_lea.vmem [#allocation2], %s156
        %s158 = smul.u32 4, %s16
        %p159 = scmp.lt.s32.totalorder %s158, 7
        %s160 = scalar_select %p159, %s158, 7
        %s161 = smul.addr %s160, 3
        %s162 = smul.addr %s161, 8
        %s163 = scalar_lea.vmem %s0, %s162
        %s164 = smul.u32 4, %s16
        %s165 = smul.u32 4, %s16
        %p166 = scmp.lt.s32.totalorder %s165, 7
        %s167 = scalar_select %p166, %s165, 7
        %s168 = smul.addr %s167, 3
        %s169 = smul.addr %s168, 8
        %s170 = scalar_lea.vmem %s1, %s169
        %s171 = smul.u32 4, %s16
        %s172 = smul.u32 4, %s16
        %v173 = vld [vmem:[%s163] sm:$0xff]
        %v174 = vld [vmem:[%s163 + $0x8] sm:$0xff]
        %v175 = vld [vmem:[%s163 + $0x10] sm:$0x3]
        %v176 = vld [vmem:[%s163 + $0x18] sm:$0xff]
        %v177 = vld [vmem:[%s163 + $0x20] sm:$0xff]
        %v178 = vld [vmem:[%s163 + $0x28] sm:$0x3]
        %v179 = vld [vmem:[%s163 + $0x30] sm:$0xff]
        %v180 = vld [vmem:[%s163 + $0x38] sm:$0xff]
        %v181 = vld [vmem:[%s163 + $0x40] sm:$0x3]
        %v182 = vld [vmem:[%s163 + $0x48] sm:$0xff]
        %v183 = vld [vmem:[%s163 + $0x50] sm:$0xff]
        %v184 = vld [vmem:[%s163 + $0x58] sm:$0x3]
        %v185 = vld [vmem:[%s170] sm:$0xff]
        %v186 = vld [vmem:[%s170 + $0x8] sm:$0xff]
        %v187 = vld [vmem:[%s170 + $0x10] sm:$0x3]
        %v188 = vld [vmem:[%s170 + $0x18] sm:$0xff]
        %v189 = vld [vmem:[%s170 + $0x20] sm:$0xff]
        %v190 = vld [vmem:[%s170 + $0x28] sm:$0x3]
        %v191 = vld [vmem:[%s170 + $0x30] sm:$0xff]
        %v192 = vld [vmem:[%s170 + $0x38] sm:$0xff]
        %v193 = vld [vmem:[%s170 + $0x40] sm:$0x3]
        %v194 = vld [vmem:[%s170 + $0x48] sm:$0xff]
        %v195 = vld [vmem:[%s170 + $0x50] sm:$0xff]
        %v196 = vld [vmem:[%s170 + $0x58] sm:$0x3]
        %209 = vrot.lane.b32.xlu0 %v173, 127
        %v210 = vpop.permute.xlu0 %209
        %211 = vrot.lane.b32.xlu0 %v174, 127
        %v212 = vpop.permute.xlu0 %211
        %213 = vrot.lane.b32.xlu0 %v175, 127
        %v214 = vpop.permute.xlu0 %213
        %215 = vrot.lane.b32.xlu0 %v176, 127
        %v216 = vpop.permute.xlu0 %215
        %217 = vrot.lane.b32.xlu0 %v177, 127
        %v218 = vpop.permute.xlu0 %217
        %219 = vrot.lane.b32.xlu0 %v178, 127
        %v220 = vpop.permute.xlu0 %219
        %221 = vrot.lane.b32.xlu0 %v179, 127
        %v222 = vpop.permute.xlu0 %221
        %223 = vrot.lane.b32.xlu0 %v180, 127
        %v224 = vpop.permute.xlu0 %223
        %225 = vrot.lane.b32.xlu0 %v181, 127
        %v226 = vpop.permute.xlu0 %225
        %227 = vrot.lane.b32.xlu0 %v182, 127
        %v228 = vpop.permute.xlu0 %227
        %229 = vrot.lane.b32.xlu0 %v183, 127
        %v230 = vpop.permute.xlu0 %229
        %231 = vrot.lane.b32.xlu0 %v184, 127
        %v232 = vpop.permute.xlu0 %231
        %v245 = vadd.f32 %v173, %v210
        %v246 = vadd.f32 %v174, %v212
        %v247 = vadd.f32 %v175, %v214
        %v248 = vadd.f32 %v176, %v216
        %v249 = vadd.f32 %v177, %v218
        %v250 = vadd.f32 %v178, %v220
        %v251 = vadd.f32 %v179, %v222
        %v252 = vadd.f32 %v180, %v224
        %v253 = vadd.f32 %v181, %v226
        %v254 = vadd.f32 %v182, %v228
        %v255 = vadd.f32 %v183, %v230
        %v256 = vadd.f32 %v184, %v232
        %257 = vrot.lane.b32.xlu0 %v173, 126
        %v258 = vpop.permute.xlu0 %257
        %259 = vrot.lane.b32.xlu0 %v174, 126
        %v260 = vpop.permute.xlu0 %259
        %261 = vrot.lane.b32.xlu0 %v175, 126
        %v262 = vpop.permute.xlu0 %261
        %263 = vrot.lane.b32.xlu0 %v176, 126
        %v264 = vpop.permute.xlu0 %263
        %265 = vrot.lane.b32.xlu0 %v177, 126
        %v266 = vpop.permute.xlu0 %265
        %267 = vrot.lane.b32.xlu0 %v178, 126
        %v268 = vpop.permute.xlu0 %267
        %269 = vrot.lane.b32.xlu0 %v179, 126
        %v270 = vpop.permute.xlu0 %269
        %271 = vrot.lane.b32.xlu0 %v180, 126
        %v272 = vpop.permute.xlu0 %271
        %273 = vrot.lane.b32.xlu0 %v181, 126
        %v274 = vpop.permute.xlu0 %273
        %275 = vrot.lane.b32.xlu0 %v182, 126
        %v276 = vpop.permute.xlu0 %275
        %277 = vrot.lane.b32.xlu0 %v183, 126
        %v278 = vpop.permute.xlu0 %277
        %279 = vrot.lane.b32.xlu0 %v184, 126
        %v280 = vpop.permute.xlu0 %279
        %v293 = vadd.f32 %v245, %v258
        %v294 = vadd.f32 %v246, %v260
        %v295 = vadd.f32 %v247, %v262
        %v296 = vadd.f32 %v248, %v264
        %v297 = vadd.f32 %v249, %v266
        %v298 = vadd.f32 %v250, %v268
        %v299 = vadd.f32 %v251, %v270
        %v300 = vadd.f32 %v252, %v272
        %v301 = vadd.f32 %v253, %v274
        %v302 = vadd.f32 %v254, %v276
        %v303 = vadd.f32 %v255, %v278
        %v304 = vadd.f32 %v256, %v280
        %vm317 = vcmask 1046528
        %v318 = vrot.slane %v293, 1
        %v319 = vrot.slane %v294, 1
        %v320 = vsel %vm317, %v318, %v319
        %v321 = vrot.slane %v295, 1
        %v322 = vsel %vm317, %v319, %v321
        %v323 = vrot.slane %v296, 1
        %v324 = vrot.slane %v297, 1
        %v325 = vsel %vm317, %v323, %v324
        %v326 = vrot.slane %v298, 1
        %v327 = vsel %vm317, %v324, %v326
        %v328 = vrot.slane %v299, 1
        %v329 = vrot.slane %v300, 1
        %v330 = vsel %vm317, %v328, %v329
        %v331 = vrot.slane %v301, 1
        %v332 = vsel %vm317, %v329, %v331
        %v333 = vrot.slane %v302, 1
        %v334 = vrot.slane %v303, 1
        %v335 = vsel %vm317, %v333, %v334
        %v336 = vrot.slane %v304, 1
        %v337 = vsel %vm317, %v334, %v336
        %v346 = vadd.f32 %v293, %v320
        %v347 = vadd.f32 %v294, %v322
        %v348 = vadd.f32 %v296, %v325
        %v349 = vadd.f32 %v297, %v327
        %v350 = vadd.f32 %v299, %v330
        %v351 = vadd.f32 %v300, %v332
        %v352 = vadd.f32 %v302, %v335
        %v353 = vadd.f32 %v303, %v337
        %vm354 = vcmask 1045504
        %v355 = vrot.slane %v293, 2
        %v356 = vrot.slane %v294, 2
        %v357 = vsel %vm354, %v355, %v356
        %v358 = vrot.slane %v295, 2
        %v359 = vsel %vm354, %v356, %v358
        %v360 = vrot.slane %v296, 2
        %v361 = vrot.slane %v297, 2
        %v362 = vsel %vm354, %v360, %v361
        %v363 = vrot.slane %v298, 2
        %v364 = vsel %vm354, %v361, %v363
        %v365 = vrot.slane %v299, 2
        %v366 = vrot.slane %v300, 2
        %v367 = vsel %vm354, %v365, %v366
        %v368 = vrot.slane %v301, 2
        %v369 = vsel %vm354, %v366, %v368
        %v370 = vrot.slane %v302, 2
        %v371 = vrot.slane %v303, 2
        %v372 = vsel %vm354, %v370, %v371
        %v373 = vrot.slane %v304, 2
        %v374 = vsel %vm354, %v371, %v373
        %v383 = vadd.f32 %v346, %v357
        %v384 = vadd.f32 %v347, %v359
        %v385 = vadd.f32 %v348, %v362
        %v386 = vadd.f32 %v349, %v364
        %v387 = vadd.f32 %v350, %v367
        %v388 = vadd.f32 %v351, %v369
        %v389 = vadd.f32 %v352, %v372
        %v390 = vadd.f32 %v353, %v374
        %v391 = vmul.f32 %v383, 0.11111111
        %v392 = vmul.f32 %v384, 0.11111111
        %v393 = vmul.f32 %v385, 0.11111111
        %v394 = vmul.f32 %v386, 0.11111111
        %v395 = vmul.f32 %v387, 0.11111111
        %v396 = vmul.f32 %v388, 0.11111111
        %v397 = vmul.f32 %v389, 0.11111111
        %v398 = vmul.f32 %v390, 0.11111111
        %411 = vrot.lane.b32.xlu0 %v185, 127
        %v412 = vpop.permute.xlu0 %411
        %413 = vrot.lane.b32.xlu0 %v186, 127
        %v414 = vpop.permute.xlu0 %413
        %415 = vrot.lane.b32.xlu0 %v187, 127
        %v416 = vpop.permute.xlu0 %415
        %417 = vrot.lane.b32.xlu0 %v188, 127
        %v418 = vpop.permute.xlu0 %417
        %419 = vrot.lane.b32.xlu0 %v189, 127
        %v420 = vpop.permute.xlu0 %419
        %421 = vrot.lane.b32.xlu0 %v190, 127
        %v422 = vpop.permute.xlu0 %421
        %423 = vrot.lane.b32.xlu0 %v191, 127
        %v424 = vpop.permute.xlu0 %423
        %425 = vrot.lane.b32.xlu0 %v192, 127
        %v426 = vpop.permute.xlu0 %425
        %427 = vrot.lane.b32.xlu0 %v193, 127
        %v428 = vpop.permute.xlu0 %427
        %429 = vrot.lane.b32.xlu0 %v194, 127
        %v430 = vpop.permute.xlu0 %429
        %431 = vrot.lane.b32.xlu0 %v195, 127
        %v432 = vpop.permute.xlu0 %431
        %433 = vrot.lane.b32.xlu0 %v196, 127
        %v434 = vpop.permute.xlu0 %433
        %v447 = vadd.f32 %v185, %v412
        %v448 = vadd.f32 %v186, %v414
        %v449 = vadd.f32 %v187, %v416
        %v450 = vadd.f32 %v188, %v418
        %v451 = vadd.f32 %v189, %v420
        %v452 = vadd.f32 %v190, %v422
        %v453 = vadd.f32 %v191, %v424
        %v454 = vadd.f32 %v192, %v426
        %v455 = vadd.f32 %v193, %v428
        %v456 = vadd.f32 %v194, %v430
        %v457 = vadd.f32 %v195, %v432
        %v458 = vadd.f32 %v196, %v434
        %459 = vrot.lane.b32.xlu0 %v185, 126
        %v460 = vpop.permute.xlu0 %459
        %461 = vrot.lane.b32.xlu0 %v186, 126
        %v462 = vpop.permute.xlu0 %461
        %463 = vrot.lane.b32.xlu0 %v187, 126
        %v464 = vpop.permute.xlu0 %463
        %465 = vrot.lane.b32.xlu0 %v188, 126
        %v466 = vpop.permute.xlu0 %465
        %467 = vrot.lane.b32.xlu0 %v189, 126
        %v468 = vpop.permute.xlu0 %467
        %469 = vrot.lane.b32.xlu0 %v190, 126
        %v470 = vpop.permute.xlu0 %469
        %471 = vrot.lane.b32.xlu0 %v191, 126
        %v472 = vpop.permute.xlu0 %471
        %473 = vrot.lane.b32.xlu0 %v192, 126
        %v474 = vpop.permute.xlu0 %473
        %475 = vrot.lane.b32.xlu0 %v193, 126
        %v476 = vpop.permute.xlu0 %475
        %477 = vrot.lane.b32.xlu0 %v194, 126
        %v478 = vpop.permute.xlu0 %477
        %479 = vrot.lane.b32.xlu0 %v195, 126
        %v480 = vpop.permute.xlu0 %479
        %481 = vrot.lane.b32.xlu0 %v196, 126
        %v482 = vpop.permute.xlu0 %481
        %v495 = vadd.f32 %v447, %v460
        %v496 = vadd.f32 %v448, %v462
        %v497 = vadd.f32 %v449, %v464
        %v498 = vadd.f32 %v450, %v466
        %v499 = vadd.f32 %v451, %v468
        %v500 = vadd.f32 %v452, %v470
        %v501 = vadd.f32 %v453, %v472
        %v502 = vadd.f32 %v454, %v474
        %v503 = vadd.f32 %v455, %v476
        %v504 = vadd.f32 %v456, %v478
        %v505 = vadd.f32 %v457, %v480
        %v506 = vadd.f32 %v458, %v482
        %v519 = vrot.slane %v495, 1
        %v520 = vrot.slane %v496, 1
        %v521 = vsel %vm317, %v519, %v520
        %v522 = vrot.slane %v497, 1
        %v523 = vsel %vm317, %v520, %v522
        %v524 = vrot.slane %v498, 1
        %v525 = vrot.slane %v499, 1
        %v526 = vsel %vm317, %v524, %v525
        %v527 = vrot.slane %v500, 1
        %v528 = vsel %vm317, %v525, %v527
        %v529 = vrot.slane %v501, 1
        %v530 = vrot.slane %v502, 1
        %v531 = vsel %vm317, %v529, %v530
        %v532 = vrot.slane %v503, 1
        %v533 = vsel %vm317, %v530, %v532
        %v534 = vrot.slane %v504, 1
        %v535 = vrot.slane %v505, 1
        %v536 = vsel %vm317, %v534, %v535
        %v537 = vrot.slane %v506, 1
        %v538 = vsel %vm317, %v535, %v537
        %v547 = vadd.f32 %v495, %v521
        %v548 = vadd.f32 %v496, %v523
        %v549 = vadd.f32 %v498, %v526
        %v550 = vadd.f32 %v499, %v528
        %v551 = vadd.f32 %v501, %v531
        %v552 = vadd.f32 %v502, %v533
        %v553 = vadd.f32 %v504, %v536
        %v554 = vadd.f32 %v505, %v538
        %v555 = vrot.slane %v495, 2
        %v556 = vrot.slane %v496, 2
        %v557 = vsel %vm354, %v555, %v556
        %v558 = vrot.slane %v497, 2
        %v559 = vsel %vm354, %v556, %v558
        %v560 = vrot.slane %v498, 2
        %v561 = vrot.slane %v499, 2
        %v562 = vsel %vm354, %v560, %v561
        %v563 = vrot.slane %v500, 2
        %v564 = vsel %vm354, %v561, %v563
        %v565 = vrot.slane %v501, 2
        %v566 = vrot.slane %v502, 2
        %v567 = vsel %vm354, %v565, %v566
        %v568 = vrot.slane %v503, 2
        %v569 = vsel %vm354, %v566, %v568
        %v570 = vrot.slane %v504, 2
        %v571 = vrot.slane %v505, 2
        %v572 = vsel %vm354, %v570, %v571
        %v573 = vrot.slane %v506, 2
        %v574 = vsel %vm354, %v571, %v573
        %v583 = vadd.f32 %v547, %v557
        %v584 = vadd.f32 %v548, %v559
        %v585 = vadd.f32 %v549, %v562
        %v586 = vadd.f32 %v550, %v564
        %v587 = vadd.f32 %v551, %v567
        %v588 = vadd.f32 %v552, %v569
        %v589 = vadd.f32 %v553, %v572
        %v590 = vadd.f32 %v554, %v574
        %v591 = vmul.f32 %v583, 0.11111111
        %v592 = vmul.f32 %v584, 0.11111111
        %v593 = vmul.f32 %v585, 0.11111111
        %v594 = vmul.f32 %v586, 0.11111111
        %v595 = vmul.f32 %v587, 0.11111111
        %v596 = vmul.f32 %v588, 0.11111111
        %v597 = vmul.f32 %v589, 0.11111111
        %v598 = vmul.f32 %v590, 0.11111111
        %v599 = vmul.f32 %v173, %v173
        %v600 = vmul.f32 %v174, %v174
        %v601 = vmul.f32 %v175, %v175
        %v602 = vmul.f32 %v176, %v176
        %v603 = vmul.f32 %v177, %v177
        %v604 = vmul.f32 %v178, %v178
        %v605 = vmul.f32 %v179, %v179
        %v606 = vmul.f32 %v180, %v180
        %v607 = vmul.f32 %v181, %v181
        %v608 = vmul.f32 %v182, %v182
        %v609 = vmul.f32 %v183, %v183
        %v610 = vmul.f32 %v184, %v184
        %623 = vrot.lane.b32.xlu0 %v599, 127
        %v624 = vpop.permute.xlu0 %623
        %625 = vrot.lane.b32.xlu0 %v600, 127
        %v626 = vpop.permute.xlu0 %625
        %627 = vrot.lane.b32.xlu0 %v601, 127
        %v628 = vpop.permute.xlu0 %627
        %629 = vrot.lane.b32.xlu0 %v602, 127
        %v630 = vpop.permute.xlu0 %629
        %631 = vrot.lane.b32.xlu0 %v603, 127
        %v632 = vpop.permute.xlu0 %631
        %633 = vrot.lane.b32.xlu0 %v604, 127
        %v634 = vpop.permute.xlu0 %633
        %635 = vrot.lane.b32.xlu0 %v605, 127
        %v636 = vpop.permute.xlu0 %635
        %637 = vrot.lane.b32.xlu0 %v606, 127
        %v638 = vpop.permute.xlu0 %637
        %639 = vrot.lane.b32.xlu0 %v607, 127
        %v640 = vpop.permute.xlu0 %639
        %641 = vrot.lane.b32.xlu0 %v608, 127
        %v642 = vpop.permute.xlu0 %641
        %643 = vrot.lane.b32.xlu0 %v609, 127
        %v644 = vpop.permute.xlu0 %643
        %645 = vrot.lane.b32.xlu0 %v610, 127
        %v646 = vpop.permute.xlu0 %645
        %v659 = vadd.f32 %v599, %v624
        %v660 = vadd.f32 %v600, %v626
        %v661 = vadd.f32 %v601, %v628
        %v662 = vadd.f32 %v602, %v630
        %v663 = vadd.f32 %v603, %v632
        %v664 = vadd.f32 %v604, %v634
        %v665 = vadd.f32 %v605, %v636
        %v666 = vadd.f32 %v606, %v638
        %v667 = vadd.f32 %v607, %v640
        %v668 = vadd.f32 %v608, %v642
        %v669 = vadd.f32 %v609, %v644
        %v670 = vadd.f32 %v610, %v646
        %671 = vrot.lane.b32.xlu0 %v599, 126
        %v672 = vpop.permute.xlu0 %671
        %673 = vrot.lane.b32.xlu0 %v600, 126
        %v674 = vpop.permute.xlu0 %673
        %675 = vrot.lane.b32.xlu0 %v601, 126
        %v676 = vpop.permute.xlu0 %675
        %677 = vrot.lane.b32.xlu0 %v602, 126
        %v678 = vpop.permute.xlu0 %677
        %679 = vrot.lane.b32.xlu0 %v603, 126
        %v680 = vpop.permute.xlu0 %679
        %681 = vrot.lane.b32.xlu0 %v604, 126
        %v682 = vpop.permute.xlu0 %681
        %683 = vrot.lane.b32.xlu0 %v605, 126
        %v684 = vpop.permute.xlu0 %683
        %685 = vrot.lane.b32.xlu0 %v606, 126
        %v686 = vpop.permute.xlu0 %685
        %687 = vrot.lane.b32.xlu0 %v607, 126
        %v688 = vpop.permute.xlu0 %687
        %689 = vrot.lane.b32.xlu0 %v608, 126
        %v690 = vpop.permute.xlu0 %689
        %691 = vrot.lane.b32.xlu0 %v609, 126
        %v692 = vpop.permute.xlu0 %691
        %693 = vrot.lane.b32.xlu0 %v610, 126
        %v694 = vpop.permute.xlu0 %693
        %v707 = vadd.f32 %v659, %v672
        %v708 = vadd.f32 %v660, %v674
        %v709 = vadd.f32 %v661, %v676
        %v710 = vadd.f32 %v662, %v678
        %v711 = vadd.f32 %v663, %v680
        %v712 = vadd.f32 %v664, %v682
        %v713 = vadd.f32 %v665, %v684
        %v714 = vadd.f32 %v666, %v686
        %v715 = vadd.f32 %v667, %v688
        %v716 = vadd.f32 %v668, %v690
        %v717 = vadd.f32 %v669, %v692
        %v718 = vadd.f32 %v670, %v694
        %v731 = vrot.slane %v707, 1
        %v732 = vrot.slane %v708, 1
        %v733 = vsel %vm317, %v731, %v732
        %v734 = vrot.slane %v709, 1
        %v735 = vsel %vm317, %v732, %v734
        %v736 = vrot.slane %v710, 1
        %v737 = vrot.slane %v711, 1
        %v738 = vsel %vm317, %v736, %v737
        %v739 = vrot.slane %v712, 1
        %v740 = vsel %vm317, %v737, %v739
        %v741 = vrot.slane %v713, 1
        %v742 = vrot.slane %v714, 1
        %v743 = vsel %vm317, %v741, %v742
        %v744 = vrot.slane %v715, 1
        %v745 = vsel %vm317, %v742, %v744
        %v746 = vrot.slane %v716, 1
        %v747 = vrot.slane %v717, 1
        %v748 = vsel %vm317, %v746, %v747
        %v749 = vrot.slane %v718, 1
        %v750 = vsel %vm317, %v747, %v749
        %v759 = vadd.f32 %v707, %v733
        %v760 = vadd.f32 %v708, %v735
        %v761 = vadd.f32 %v710, %v738
        %v762 = vadd.f32 %v711, %v740
        %v763 = vadd.f32 %v713, %v743
        %v764 = vadd.f32 %v714, %v745
        %v765 = vadd.f32 %v716, %v748
        %v766 = vadd.f32 %v717, %v750
        %v767 = vrot.slane %v707, 2
        %v768 = vrot.slane %v708, 2
        %v769 = vsel %vm354, %v767, %v768
        %v770 = vrot.slane %v709, 2
        %v771 = vsel %vm354, %v768, %v770
        %v772 = vrot.slane %v710, 2
        %v773 = vrot.slane %v711, 2
        %v774 = vsel %vm354, %v772, %v773
        %v775 = vrot.slane %v712, 2
        %v776 = vsel %vm354, %v773, %v775
        %v777 = vrot.slane %v713, 2
        %v778 = vrot.slane %v714, 2
        %v779 = vsel %vm354, %v777, %v778
        %v780 = vrot.slane %v715, 2
        %v781 = vsel %vm354, %v778, %v780
        %v782 = vrot.slane %v716, 2
        %v783 = vrot.slane %v717, 2
        %v784 = vsel %vm354, %v782, %v783
        %v785 = vrot.slane %v718, 2
        %v786 = vsel %vm354, %v783, %v785
        %v795 = vadd.f32 %v759, %v769
        %v796 = vadd.f32 %v760, %v771
        %v797 = vadd.f32 %v761, %v774
        %v798 = vadd.f32 %v762, %v776
        %v799 = vadd.f32 %v763, %v779
        %v800 = vadd.f32 %v764, %v781
        %v801 = vadd.f32 %v765, %v784
        %v802 = vadd.f32 %v766, %v786
        %v803 = vmul.f32 %v795, 0.11111111
        %v804 = vmul.f32 %v796, 0.11111111
        %v805 = vmul.f32 %v797, 0.11111111
        %v806 = vmul.f32 %v798, 0.11111111
        %v807 = vmul.f32 %v799, 0.11111111
        %v808 = vmul.f32 %v800, 0.11111111
        %v809 = vmul.f32 %v801, 0.11111111
        %v810 = vmul.f32 %v802, 0.11111111
        %v811 = vmul.f32 %v391, %v391
        %v812 = vmul.f32 %v392, %v392
        %v813 = vmul.f32 %v393, %v393
        %v814 = vmul.f32 %v394, %v394
        %v815 = vmul.f32 %v395, %v395
        %v816 = vmul.f32 %v396, %v396
        %v817 = vmul.f32 %v397, %v397
        %v818 = vmul.f32 %v398, %v398
        %v819 = vsub.f32 %v803, %v811
        %v820 = vsub.f32 %v804, %v812
        %v821 = vsub.f32 %v805, %v813
        %v822 = vsub.f32 %v806, %v814
        %v823 = vsub.f32 %v807, %v815
        %v824 = vsub.f32 %v808, %v816
        %v825 = vsub.f32 %v809, %v817
        %v826 = vsub.f32 %v810, %v818
        %v827 = vmul.f32 %v185, %v185
        %v828 = vmul.f32 %v186, %v186
        %v829 = vmul.f32 %v187, %v187
        %v830 = vmul.f32 %v188, %v188
        %v831 = vmul.f32 %v189, %v189
        %v832 = vmul.f32 %v190, %v190
        %v833 = vmul.f32 %v191, %v191
        %v834 = vmul.f32 %v192, %v192
        %v835 = vmul.f32 %v193, %v193
        %v836 = vmul.f32 %v194, %v194
        %v837 = vmul.f32 %v195, %v195
        %v838 = vmul.f32 %v196, %v196
        %851 = vrot.lane.b32.xlu0 %v827, 127
        %v852 = vpop.permute.xlu0 %851
        %853 = vrot.lane.b32.xlu0 %v828, 127
        %v854 = vpop.permute.xlu0 %853
        %855 = vrot.lane.b32.xlu0 %v829, 127
        %v856 = vpop.permute.xlu0 %855
        %857 = vrot.lane.b32.xlu0 %v830, 127
        %v858 = vpop.permute.xlu0 %857
        %859 = vrot.lane.b32.xlu0 %v831, 127
        %v860 = vpop.permute.xlu0 %859
        %861 = vrot.lane.b32.xlu0 %v832, 127
        %v862 = vpop.permute.xlu0 %861
        %863 = vrot.lane.b32.xlu0 %v833, 127
        %v864 = vpop.permute.xlu0 %863
        %865 = vrot.lane.b32.xlu0 %v834, 127
        %v866 = vpop.permute.xlu0 %865
        %867 = vrot.lane.b32.xlu0 %v835, 127
        %v868 = vpop.permute.xlu0 %867
        %869 = vrot.lane.b32.xlu0 %v836, 127
        %v870 = vpop.permute.xlu0 %869
        %871 = vrot.lane.b32.xlu0 %v837, 127
        %v872 = vpop.permute.xlu0 %871
        %873 = vrot.lane.b32.xlu0 %v838, 127
        %v874 = vpop.permute.xlu0 %873
        %v887 = vadd.f32 %v827, %v852
        %v888 = vadd.f32 %v828, %v854
        %v889 = vadd.f32 %v829, %v856
        %v890 = vadd.f32 %v830, %v858
        %v891 = vadd.f32 %v831, %v860
        %v892 = vadd.f32 %v832, %v862
        %v893 = vadd.f32 %v833, %v864
        %v894 = vadd.f32 %v834, %v866
        %v895 = vadd.f32 %v835, %v868
        %v896 = vadd.f32 %v836, %v870
        %v897 = vadd.f32 %v837, %v872
        %v898 = vadd.f32 %v838, %v874
        %899 = vrot.lane.b32.xlu0 %v827, 126
        %v900 = vpop.permute.xlu0 %899
        %901 = vrot.lane.b32.xlu0 %v828, 126
        %v902 = vpop.permute.xlu0 %901
        %903 = vrot.lane.b32.xlu0 %v829, 126
        %v904 = vpop.permute.xlu0 %903
        %905 = vrot.lane.b32.xlu0 %v830, 126
        %v906 = vpop.permute.xlu0 %905
        %907 = vrot.lane.b32.xlu0 %v831, 126
        %v908 = vpop.permute.xlu0 %907
        %909 = vrot.lane.b32.xlu0 %v832, 126
        %v910 = vpop.permute.xlu0 %909
        %911 = vrot.lane.b32.xlu0 %v833, 126
        %v912 = vpop.permute.xlu0 %911
        %913 = vrot.lane.b32.xlu0 %v834, 126
        %v914 = vpop.permute.xlu0 %913
        %915 = vrot.lane.b32.xlu0 %v835, 126
        %v916 = vpop.permute.xlu0 %915
        %917 = vrot.lane.b32.xlu0 %v836, 126
        %v918 = vpop.permute.xlu0 %917
        %919 = vrot.lane.b32.xlu0 %v837, 126
        %v920 = vpop.permute.xlu0 %919
        %921 = vrot.lane.b32.xlu0 %v838, 126
        %v922 = vpop.permute.xlu0 %921
        %v935 = vadd.f32 %v887, %v900
        %v936 = vadd.f32 %v888, %v902
        %v937 = vadd.f32 %v889, %v904
        %v938 = vadd.f32 %v890, %v906
        %v939 = vadd.f32 %v891, %v908
        %v940 = vadd.f32 %v892, %v910
        %v941 = vadd.f32 %v893, %v912
        %v942 = vadd.f32 %v894, %v914
        %v943 = vadd.f32 %v895, %v916
        %v944 = vadd.f32 %v896, %v918
        %v945 = vadd.f32 %v897, %v920
        %v946 = vadd.f32 %v898, %v922
        %v959 = vrot.slane %v935, 1
        %v960 = vrot.slane %v936, 1
        %v961 = vsel %vm317, %v959, %v960
        %v962 = vrot.slane %v937, 1
        %v963 = vsel %vm317, %v960, %v962
        %v964 = vrot.slane %v938, 1
        %v965 = vrot.slane %v939, 1
        %v966 = vsel %vm317, %v964, %v965
        %v967 = vrot.slane %v940, 1
        %v968 = vsel %vm317, %v965, %v967
        %v969 = vrot.slane %v941, 1
        %v970 = vrot.slane %v942, 1
        %v971 = vsel %vm317, %v969, %v970
        %v972 = vrot.slane %v943, 1
        %v973 = vsel %vm317, %v970, %v972
        %v974 = vrot.slane %v944, 1
        %v975 = vrot.slane %v945, 1
        %v976 = vsel %vm317, %v974, %v975
        %v977 = vrot.slane %v946, 1
        %v978 = vsel %vm317, %v975, %v977
        %v987 = vadd.f32 %v935, %v961
        %v988 = vadd.f32 %v936, %v963
        %v989 = vadd.f32 %v938, %v966
        %v990 = vadd.f32 %v939, %v968
        %v991 = vadd.f32 %v941, %v971
        %v992 = vadd.f32 %v942, %v973
        %v993 = vadd.f32 %v944, %v976
        %v994 = vadd.f32 %v945, %v978
        %v995 = vrot.slane %v935, 2
        %v996 = vrot.slane %v936, 2
        %v997 = vsel %vm354, %v995, %v996
        %v998 = vrot.slane %v937, 2
        %v999 = vsel %vm354, %v996, %v998
        %v1000 = vrot.slane %v938, 2
        %v1001 = vrot.slane %v939, 2
        %v1002 = vsel %vm354, %v1000, %v1001
        %v1003 = vrot.slane %v940, 2
        %v1004 = vsel %vm354, %v1001, %v1003
        %v1005 = vrot.slane %v941, 2
        %v1006 = vrot.slane %v942, 2
        %v1007 = vsel %vm354, %v1005, %v1006
        %v1008 = vrot.slane %v943, 2
        %v1009 = vsel %vm354, %v1006, %v1008
        %v1010 = vrot.slane %v944, 2
        %v1011 = vrot.slane %v945, 2
        %v1012 = vsel %vm354, %v1010, %v1011
        %v1013 = vrot.slane %v946, 2
        %v1014 = vsel %vm354, %v1011, %v1013
        %v1023 = vadd.f32 %v987, %v997
        %v1024 = vadd.f32 %v988, %v999
        %v1025 = vadd.f32 %v989, %v1002
        %v1026 = vadd.f32 %v990, %v1004
        %v1027 = vadd.f32 %v991, %v1007
        %v1028 = vadd.f32 %v992, %v1009
        %v1029 = vadd.f32 %v993, %v1012
        %v1030 = vadd.f32 %v994, %v1014
        %v1031 = vmul.f32 %v1023, 0.11111111
        %v1032 = vmul.f32 %v1024, 0.11111111
        %v1033 = vmul.f32 %v1025, 0.11111111
        %v1034 = vmul.f32 %v1026, 0.11111111
        %v1035 = vmul.f32 %v1027, 0.11111111
        %v1036 = vmul.f32 %v1028, 0.11111111
        %v1037 = vmul.f32 %v1029, 0.11111111
        %v1038 = vmul.f32 %v1030, 0.11111111
        %v1039 = vmul.f32 %v591, %v591
        %v1040 = vmul.f32 %v592, %v592
        %v1041 = vmul.f32 %v593, %v593
        %v1042 = vmul.f32 %v594, %v594
        %v1043 = vmul.f32 %v595, %v595
        %v1044 = vmul.f32 %v596, %v596
        %v1045 = vmul.f32 %v597, %v597
        %v1046 = vmul.f32 %v598, %v598
        %v1047 = vsub.f32 %v1031, %v1039
        %v1048 = vsub.f32 %v1032, %v1040
        %v1049 = vsub.f32 %v1033, %v1041
        %v1050 = vsub.f32 %v1034, %v1042
        %v1051 = vsub.f32 %v1035, %v1043
        %v1052 = vsub.f32 %v1036, %v1044
        %v1053 = vsub.f32 %v1037, %v1045
        %v1054 = vsub.f32 %v1038, %v1046
        %v1055 = vmul.f32 %v173, %v185
        %v1056 = vmul.f32 %v174, %v186
        %v1057 = vmul.f32 %v175, %v187
        %v1058 = vmul.f32 %v176, %v188
        %v1059 = vmul.f32 %v177, %v189
        %v1060 = vmul.f32 %v178, %v190
        %v1061 = vmul.f32 %v179, %v191
        %v1062 = vmul.f32 %v180, %v192
        %v1063 = vmul.f32 %v181, %v193
        %v1064 = vmul.f32 %v182, %v194
        %v1065 = vmul.f32 %v183, %v195
        %v1066 = vmul.f32 %v184, %v196
        %1079 = vrot.lane.b32.xlu0 %v1055, 127
        %v1080 = vpop.permute.xlu0 %1079
        %1081 = vrot.lane.b32.xlu0 %v1056, 127
        %v1082 = vpop.permute.xlu0 %1081
        %1083 = vrot.lane.b32.xlu0 %v1057, 127
        %v1084 = vpop.permute.xlu0 %1083
        %1085 = vrot.lane.b32.xlu0 %v1058, 127
        %v1086 = vpop.permute.xlu0 %1085
        %1087 = vrot.lane.b32.xlu0 %v1059, 127
        %v1088 = vpop.permute.xlu0 %1087
        %1089 = vrot.lane.b32.xlu0 %v1060, 127
        %v1090 = vpop.permute.xlu0 %1089
        %1091 = vrot.lane.b32.xlu0 %v1061, 127
        %v1092 = vpop.permute.xlu0 %1091
        %1093 = vrot.lane.b32.xlu0 %v1062, 127
        %v1094 = vpop.permute.xlu0 %1093
        %1095 = vrot.lane.b32.xlu0 %v1063, 127
        %v1096 = vpop.permute.xlu0 %1095
        %1097 = vrot.lane.b32.xlu0 %v1064, 127
        %v1098 = vpop.permute.xlu0 %1097
        %1099 = vrot.lane.b32.xlu0 %v1065, 127
        %v1100 = vpop.permute.xlu0 %1099
        %1101 = vrot.lane.b32.xlu0 %v1066, 127
        %v1102 = vpop.permute.xlu0 %1101
        %v1115 = vadd.f32 %v1055, %v1080
        %v1116 = vadd.f32 %v1056, %v1082
        %v1117 = vadd.f32 %v1057, %v1084
        %v1118 = vadd.f32 %v1058, %v1086
        %v1119 = vadd.f32 %v1059, %v1088
        %v1120 = vadd.f32 %v1060, %v1090
        %v1121 = vadd.f32 %v1061, %v1092
        %v1122 = vadd.f32 %v1062, %v1094
        %v1123 = vadd.f32 %v1063, %v1096
        %v1124 = vadd.f32 %v1064, %v1098
        %v1125 = vadd.f32 %v1065, %v1100
        %v1126 = vadd.f32 %v1066, %v1102
        %1127 = vrot.lane.b32.xlu0 %v1055, 126
        %v1128 = vpop.permute.xlu0 %1127
        %1129 = vrot.lane.b32.xlu0 %v1056, 126
        %v1130 = vpop.permute.xlu0 %1129
        %1131 = vrot.lane.b32.xlu0 %v1057, 126
        %v1132 = vpop.permute.xlu0 %1131
        %1133 = vrot.lane.b32.xlu0 %v1058, 126
        %v1134 = vpop.permute.xlu0 %1133
        %1135 = vrot.lane.b32.xlu0 %v1059, 126
        %v1136 = vpop.permute.xlu0 %1135
        %1137 = vrot.lane.b32.xlu0 %v1060, 126
        %v1138 = vpop.permute.xlu0 %1137
        %1139 = vrot.lane.b32.xlu0 %v1061, 126
        %v1140 = vpop.permute.xlu0 %1139
        %1141 = vrot.lane.b32.xlu0 %v1062, 126
        %v1142 = vpop.permute.xlu0 %1141
        %1143 = vrot.lane.b32.xlu0 %v1063, 126
        %v1144 = vpop.permute.xlu0 %1143
        %1145 = vrot.lane.b32.xlu0 %v1064, 126
        %v1146 = vpop.permute.xlu0 %1145
        %1147 = vrot.lane.b32.xlu0 %v1065, 126
        %v1148 = vpop.permute.xlu0 %1147
        %1149 = vrot.lane.b32.xlu0 %v1066, 126
        %v1150 = vpop.permute.xlu0 %1149
        %v1163 = vadd.f32 %v1115, %v1128
        %v1164 = vadd.f32 %v1116, %v1130
        %v1165 = vadd.f32 %v1117, %v1132
        %v1166 = vadd.f32 %v1118, %v1134
        %v1167 = vadd.f32 %v1119, %v1136
        %v1168 = vadd.f32 %v1120, %v1138
        %v1169 = vadd.f32 %v1121, %v1140
        %v1170 = vadd.f32 %v1122, %v1142
        %v1171 = vadd.f32 %v1123, %v1144
        %v1172 = vadd.f32 %v1124, %v1146
        %v1173 = vadd.f32 %v1125, %v1148
        %v1174 = vadd.f32 %v1126, %v1150
        %v1187 = vrot.slane %v1163, 1
        %v1188 = vrot.slane %v1164, 1
        %v1189 = vsel %vm317, %v1187, %v1188
        %v1190 = vrot.slane %v1165, 1
        %v1191 = vsel %vm317, %v1188, %v1190
        %v1192 = vrot.slane %v1166, 1
        %v1193 = vrot.slane %v1167, 1
        %v1194 = vsel %vm317, %v1192, %v1193
        %v1195 = vrot.slane %v1168, 1
        %v1196 = vsel %vm317, %v1193, %v1195
        %v1197 = vrot.slane %v1169, 1
        %v1198 = vrot.slane %v1170, 1
        %v1199 = vsel %vm317, %v1197, %v1198
        %v1200 = vrot.slane %v1171, 1
        %v1201 = vsel %vm317, %v1198, %v1200
        %v1202 = vrot.slane %v1172, 1
        %v1203 = vrot.slane %v1173, 1
        %v1204 = vsel %vm317, %v1202, %v1203
        %v1205 = vrot.slane %v1174, 1
        %v1206 = vsel %vm317, %v1203, %v1205
        %v1215 = vadd.f32 %v1163, %v1189
        %v1216 = vadd.f32 %v1164, %v1191
        %v1217 = vadd.f32 %v1166, %v1194
        %v1218 = vadd.f32 %v1167, %v1196
        %v1219 = vadd.f32 %v1169, %v1199
        %v1220 = vadd.f32 %v1170, %v1201
        %v1221 = vadd.f32 %v1172, %v1204
        %v1222 = vadd.f32 %v1173, %v1206
        %v1223 = vrot.slane %v1163, 2
        %v1224 = vrot.slane %v1164, 2
        %v1225 = vsel %vm354, %v1223, %v1224
        %v1226 = vrot.slane %v1165, 2
        %v1227 = vsel %vm354, %v1224, %v1226
        %v1228 = vrot.slane %v1166, 2
        %v1229 = vrot.slane %v1167, 2
        %v1230 = vsel %vm354, %v1228, %v1229
        %v1231 = vrot.slane %v1168, 2
        %v1232 = vsel %vm354, %v1229, %v1231
        %v1233 = vrot.slane %v1169, 2
        %v1234 = vrot.slane %v1170, 2
        %v1235 = vsel %vm354, %v1233, %v1234
        %v1236 = vrot.slane %v1171, 2
        %v1237 = vsel %vm354, %v1234, %v1236
        %v1238 = vrot.slane %v1172, 2
        %v1239 = vrot.slane %v1173, 2
        %v1240 = vsel %vm354, %v1238, %v1239
        %v1241 = vrot.slane %v1174, 2
        %v1242 = vsel %vm354, %v1239, %v1241
        %v1251 = vadd.f32 %v1215, %v1225
        %v1252 = vadd.f32 %v1216, %v1227
        %v1253 = vadd.f32 %v1217, %v1230
        %v1254 = vadd.f32 %v1218, %v1232
        %v1255 = vadd.f32 %v1219, %v1235
        %v1256 = vadd.f32 %v1220, %v1237
        %v1257 = vadd.f32 %v1221, %v1240
        %v1258 = vadd.f32 %v1222, %v1242
        %v1259 = vmul.f32 %v1251, 0.11111111
        %v1260 = vmul.f32 %v1252, 0.11111111
        %v1261 = vmul.f32 %v1253, 0.11111111
        %v1262 = vmul.f32 %v1254, 0.11111111
        %v1263 = vmul.f32 %v1255, 0.11111111
        %v1264 = vmul.f32 %v1256, 0.11111111
        %v1265 = vmul.f32 %v1257, 0.11111111
        %v1266 = vmul.f32 %v1258, 0.11111111
        %v1267 = vmul.f32 %v391, %v591
        %v1268 = vmul.f32 %v392, %v592
        %v1269 = vmul.f32 %v393, %v593
        %v1270 = vmul.f32 %v394, %v594
        %v1271 = vmul.f32 %v395, %v595
        %v1272 = vmul.f32 %v396, %v596
        %v1273 = vmul.f32 %v397, %v597
        %v1274 = vmul.f32 %v398, %v598
        %v1275 = vsub.f32 %v1259, %v1267
        %v1276 = vsub.f32 %v1260, %v1268
        %v1277 = vsub.f32 %v1261, %v1269
        %v1278 = vsub.f32 %v1262, %v1270
        %v1279 = vsub.f32 %v1263, %v1271
        %v1280 = vsub.f32 %v1264, %v1272
        %v1281 = vsub.f32 %v1265, %v1273
        %v1282 = vsub.f32 %v1266, %v1274
        %v1283 = vmul.f32 %v391, 2.0
        %v1284 = vmul.f32 %v392, 2.0
        %v1285 = vmul.f32 %v393, 2.0
        %v1286 = vmul.f32 %v394, 2.0
        %v1287 = vmul.f32 %v395, 2.0
        %v1288 = vmul.f32 %v396, 2.0
        %v1289 = vmul.f32 %v397, 2.0
        %v1290 = vmul.f32 %v398, 2.0
        %v1291 = vmul.f32 %v1283, %v591
        %v1292 = vmul.f32 %v1284, %v592
        %v1293 = vmul.f32 %v1285, %v593
        %v1294 = vmul.f32 %v1286, %v594
        %v1295 = vmul.f32 %v1287, %v595
        %v1296 = vmul.f32 %v1288, %v596
        %v1297 = vmul.f32 %v1289, %v597
        %v1298 = vmul.f32 %v1290, %v598
        %v1299 = vadd.f32 %v1291, 0.0001
        %v1300 = vadd.f32 %v1292, 0.0001
        %v1301 = vadd.f32 %v1293, 0.0001
        %v1302 = vadd.f32 %v1294, 0.0001
        %v1303 = vadd.f32 %v1295, 0.0001
        %v1304 = vadd.f32 %v1296, 0.0001
        %v1305 = vadd.f32 %v1297, 0.0001
        %v1306 = vadd.f32 %v1298, 0.0001
        %v1307 = vmul.f32 %v1275, 2.0
        %v1308 = vmul.f32 %v1276, 2.0
        %v1309 = vmul.f32 %v1277, 2.0
        %v1310 = vmul.f32 %v1278, 2.0
        %v1311 = vmul.f32 %v1279, 2.0
        %v1312 = vmul.f32 %v1280, 2.0
        %v1313 = vmul.f32 %v1281, 2.0
        %v1314 = vmul.f32 %v1282, 2.0
        %v1315 = vadd.f32 %v1307, 0.0009
        %v1316 = vadd.f32 %v1308, 0.0009
        %v1317 = vadd.f32 %v1309, 0.0009
        %v1318 = vadd.f32 %v1310, 0.0009
        %v1319 = vadd.f32 %v1311, 0.0009
        %v1320 = vadd.f32 %v1312, 0.0009
        %v1321 = vadd.f32 %v1313, 0.0009
        %v1322 = vadd.f32 %v1314, 0.0009
        %v1323 = vmul.f32 %v1299, %v1315
        %v1324 = vmul.f32 %v1300, %v1316
        %v1325 = vmul.f32 %v1301, %v1317
        %v1326 = vmul.f32 %v1302, %v1318
        %v1327 = vmul.f32 %v1303, %v1319
        %v1328 = vmul.f32 %v1304, %v1320
        %v1329 = vmul.f32 %v1305, %v1321
        %v1330 = vmul.f32 %v1306, %v1322
        %v1331 = vadd.f32 %v811, %v1039
        %v1332 = vadd.f32 %v812, %v1040
        %v1333 = vadd.f32 %v813, %v1041
        %v1334 = vadd.f32 %v814, %v1042
        %v1335 = vadd.f32 %v815, %v1043
        %v1336 = vadd.f32 %v816, %v1044
        %v1337 = vadd.f32 %v817, %v1045
        %v1338 = vadd.f32 %v818, %v1046
        %v1339 = vadd.f32 %v1331, 0.0001
        %v1340 = vadd.f32 %v1332, 0.0001
        %v1341 = vadd.f32 %v1333, 0.0001
        %v1342 = vadd.f32 %v1334, 0.0001
        %v1343 = vadd.f32 %v1335, 0.0001
        %v1344 = vadd.f32 %v1336, 0.0001
        %v1345 = vadd.f32 %v1337, 0.0001
        %v1346 = vadd.f32 %v1338, 0.0001
        %v1347 = vadd.f32 %v819, %v1047
        %v1348 = vadd.f32 %v820, %v1048
        %v1349 = vadd.f32 %v821, %v1049
        %v1350 = vadd.f32 %v822, %v1050
        %v1351 = vadd.f32 %v823, %v1051
        %v1352 = vadd.f32 %v824, %v1052
        %v1353 = vadd.f32 %v825, %v1053
        %v1354 = vadd.f32 %v826, %v1054
        %v1355 = vadd.f32 %v1347, 0.0009
        %v1356 = vadd.f32 %v1348, 0.0009
        %v1357 = vadd.f32 %v1349, 0.0009
        %v1358 = vadd.f32 %v1350, 0.0009
        %v1359 = vadd.f32 %v1351, 0.0009
        %v1360 = vadd.f32 %v1352, 0.0009
        %v1361 = vadd.f32 %v1353, 0.0009
        %v1362 = vadd.f32 %v1354, 0.0009
        %v1363 = vmul.f32 %v1339, %v1355
        %v1364 = vmul.f32 %v1340, %v1356
        %v1365 = vmul.f32 %v1341, %v1357
        %v1366 = vmul.f32 %v1342, %v1358
        %v1367 = vmul.f32 %v1343, %v1359
        %v1368 = vmul.f32 %v1344, %v1360
        %v1369 = vmul.f32 %v1345, %v1361
        %v1370 = vmul.f32 %v1346, %v1362
        %v1371 = vrcp.pop %v1363
        %v1372 = vmul.f32 %v1363, %v1371
        %v1373 = vsub.f32 1.0, %v1372
        %v1374 = vmul.f32 %v1371, %v1373
        %v1375 = vadd.f32 %v1371, %v1374
        %vm1376 = vweird.f32 %v1363
        %vm1377 = vweird.f32 %v1371
        %vm1378 = vmor %vm1376, %vm1377
        %v1379 = vsel %vm1378, %v1371, %v1375
        %v1380 = vand.u32 2147483647, %v1363
        %vm1381 = vcmp.eq.f32.partialorder %v1380, 8.507059e+37
        %v1382 = vand.u32 %v1363, 2147483648
        %v1383 = vor.u32 1.1754944e-38, %v1382
        %v1384 = vsel %vm1381, %v1383, %v1379
        %v1385 = vmul.f32 %v1323, %v1384
        %v1386 = vrcp.pop %v1364
        %v1387 = vmul.f32 %v1364, %v1386
        %v1388 = vsub.f32 1.0, %v1387
        %v1389 = vmul.f32 %v1386, %v1388
        %v1390 = vadd.f32 %v1386, %v1389
        %vm1391 = vweird.f32 %v1364
        %vm1392 = vweird.f32 %v1386
        %vm1393 = vmor %vm1391, %vm1392
        %v1394 = vsel %vm1393, %v1386, %v1390
        %v1395 = vand.u32 2147483647, %v1364
        %vm1396 = vcmp.eq.f32.partialorder %v1395, 8.507059e+37
        %v1397 = vand.u32 %v1364, 2147483648
        %v1398 = vor.u32 1.1754944e-38, %v1397
        %v1399 = vsel %vm1396, %v1398, %v1394
        %v1400 = vmul.f32 %v1324, %v1399
        %v1401 = vrcp.pop %v1365
        %v1402 = vmul.f32 %v1365, %v1401
        %v1403 = vsub.f32 1.0, %v1402
        %v1404 = vmul.f32 %v1401, %v1403
        %v1405 = vadd.f32 %v1401, %v1404
        %vm1406 = vweird.f32 %v1365
        %vm1407 = vweird.f32 %v1401
        %vm1408 = vmor %vm1406, %vm1407
        %v1409 = vsel %vm1408, %v1401, %v1405
        %v1410 = vand.u32 2147483647, %v1365
        %vm1411 = vcmp.eq.f32.partialorder %v1410, 8.507059e+37
        %v1412 = vand.u32 %v1365, 2147483648
        %v1413 = vor.u32 1.1754944e-38, %v1412
        %v1414 = vsel %vm1411, %v1413, %v1409
        %v1415 = vmul.f32 %v1325, %v1414
        %v1416 = vrcp.pop %v1366
        %v1417 = vmul.f32 %v1366, %v1416
        %v1418 = vsub.f32 1.0, %v1417
        %v1419 = vmul.f32 %v1416, %v1418
        %v1420 = vadd.f32 %v1416, %v1419
        %vm1421 = vweird.f32 %v1366
        %vm1422 = vweird.f32 %v1416
        %vm1423 = vmor %vm1421, %vm1422
        %v1424 = vsel %vm1423, %v1416, %v1420
        %v1425 = vand.u32 2147483647, %v1366
        %vm1426 = vcmp.eq.f32.partialorder %v1425, 8.507059e+37
        %v1427 = vand.u32 %v1366, 2147483648
        %v1428 = vor.u32 1.1754944e-38, %v1427
        %v1429 = vsel %vm1426, %v1428, %v1424
        %v1430 = vmul.f32 %v1326, %v1429
        %v1431 = vrcp.pop %v1367
        %v1432 = vmul.f32 %v1367, %v1431
        %v1433 = vsub.f32 1.0, %v1432
        %v1434 = vmul.f32 %v1431, %v1433
        %v1435 = vadd.f32 %v1431, %v1434
        %vm1436 = vweird.f32 %v1367
        %vm1437 = vweird.f32 %v1431
        %vm1438 = vmor %vm1436, %vm1437
        %v1439 = vsel %vm1438, %v1431, %v1435
        %v1440 = vand.u32 2147483647, %v1367
        %vm1441 = vcmp.eq.f32.partialorder %v1440, 8.507059e+37
        %v1442 = vand.u32 %v1367, 2147483648
        %v1443 = vor.u32 1.1754944e-38, %v1442
        %v1444 = vsel %vm1441, %v1443, %v1439
        %v1445 = vmul.f32 %v1327, %v1444
        %v1446 = vrcp.pop %v1368
        %v1447 = vmul.f32 %v1368, %v1446
        %v1448 = vsub.f32 1.0, %v1447
        %v1449 = vmul.f32 %v1446, %v1448
        %v1450 = vadd.f32 %v1446, %v1449
        %vm1451 = vweird.f32 %v1368
        %vm1452 = vweird.f32 %v1446
        %vm1453 = vmor %vm1451, %vm1452
        %v1454 = vsel %vm1453, %v1446, %v1450
        %v1455 = vand.u32 2147483647, %v1368
        %vm1456 = vcmp.eq.f32.partialorder %v1455, 8.507059e+37
        %v1457 = vand.u32 %v1368, 2147483648
        %v1458 = vor.u32 1.1754944e-38, %v1457
        %v1459 = vsel %vm1456, %v1458, %v1454
        %v1460 = vmul.f32 %v1328, %v1459
        %v1461 = vrcp.pop %v1369
        %v1462 = vmul.f32 %v1369, %v1461
        %v1463 = vsub.f32 1.0, %v1462
        %v1464 = vmul.f32 %v1461, %v1463
        %v1465 = vadd.f32 %v1461, %v1464
        %vm1466 = vweird.f32 %v1369
        %vm1467 = vweird.f32 %v1461
        %vm1468 = vmor %vm1466, %vm1467
        %v1469 = vsel %vm1468, %v1461, %v1465
        %v1470 = vand.u32 2147483647, %v1369
        %vm1471 = vcmp.eq.f32.partialorder %v1470, 8.507059e+37
        %v1472 = vand.u32 %v1369, 2147483648
        %v1473 = vor.u32 1.1754944e-38, %v1472
        %v1474 = vsel %vm1471, %v1473, %v1469
        %v1475 = vmul.f32 %v1329, %v1474
        %v1476 = vrcp.pop %v1370
        %v1477 = vmul.f32 %v1370, %v1476
        %v1478 = vsub.f32 1.0, %v1477
        %v1479 = vmul.f32 %v1476, %v1478
        %v1480 = vadd.f32 %v1476, %v1479
        %vm1481 = vweird.f32 %v1370
        %vm1482 = vweird.f32 %v1476
        %vm1483 = vmor %vm1481, %vm1482
        %v1484 = vsel %vm1483, %v1476, %v1480
        %v1485 = vand.u32 2147483647, %v1370
        %vm1486 = vcmp.eq.f32.partialorder %v1485, 8.507059e+37
        %v1487 = vand.u32 %v1370, 2147483648
        %v1488 = vor.u32 1.1754944e-38, %v1487
        %v1489 = vsel %vm1486, %v1488, %v1484
        %v1490 = vmul.f32 %v1330, %v1489
        %v1491 = vsub.f32 1.0, %v1385
        %v1492 = vsub.f32 1.0, %v1400
        %v1493 = vsub.f32 1.0, %v1415
        %v1494 = vsub.f32 1.0, %v1430
        %v1495 = vsub.f32 1.0, %v1445
        %v1496 = vsub.f32 1.0, %v1460
        %v1497 = vsub.f32 1.0, %v1475
        %v1498 = vsub.f32 1.0, %v1490
        %v1499 = vmul.f32 %v1491, 0.5
        %v1500 = vmul.f32 %v1492, 0.5
        %v1501 = vmul.f32 %v1493, 0.5
        %v1502 = vmul.f32 %v1494, 0.5
        %v1503 = vmul.f32 %v1495, 0.5
        %v1504 = vmul.f32 %v1496, 0.5
        %v1505 = vmul.f32 %v1497, 0.5
        %v1506 = vmul.f32 %v1498, 0.5
        %v1507 = vmax.f32 %v1499, 0.0
        %v1508 = vmax.f32 %v1500, 0.0
        %v1509 = vmax.f32 %v1501, 0.0
        %v1510 = vmax.f32 %v1502, 0.0
        %v1511 = vmax.f32 %v1503, 0.0
        %v1512 = vmax.f32 %v1504, 0.0
        %v1513 = vmax.f32 %v1505, 0.0
        %v1514 = vmax.f32 %v1506, 0.0
        %v1515 = vmin.f32 %v1507, 1.0
        %v1516 = vmin.f32 %v1508, 1.0
        %v1517 = vmin.f32 %v1509, 1.0
        %v1518 = vmin.f32 %v1510, 1.0
        %v1519 = vmin.f32 %v1511, 1.0
        %v1520 = vmin.f32 %v1512, 1.0
        %v1521 = vmin.f32 %v1513, 1.0
        %v1522 = vmin.f32 %v1514, 1.0
        %vm1523 = vcmask 130048
        %1524 = vst.msk [vmem:[%s157] sm:$0xff] %vm1523, %v1515
        %1525 = vst.msk [vmem:[%s157 + $0x8] sm:$0xff] %vm1523, %v1516
        %1526 = vst.msk [vmem:[%s157 + $0x10] sm:$0xff] %vm1523, %v1517
        %1527 = vst.msk [vmem:[%s157 + $0x18] sm:$0xff] %vm1523, %v1518
        %1528 = vst.msk [vmem:[%s157 + $0x20] sm:$0xff] %vm1523, %v1519
        %1529 = vst.msk [vmem:[%s157 + $0x28] sm:$0xff] %vm1523, %v1520
        %1530 = vst.msk [vmem:[%s157 + $0x30] sm:$0xff] %vm1523, %v1521
        %1531 = vst.msk [vmem:[%s157 + $0x38] sm:$0xff] %vm1523, %v1522
        %s1532 = sand.u32 %s76, 1
        %s1533 = scalar_lea.sflag [#allocation3], %s1532
        %s1534 = sand.u32 %s76, 1
        %s1535 = smul.addr %s1534, 64
        %s1536 = scalar_lea.vmem [#allocation2], %s1535
        // Predicated region
        $region29: #{tpu_custom_call.1} parent=27 // pred_check
          %p1537 = pneg %p86
        $region30: #{tpu_custom_call.1} parent=27 // pred_check_branch
          %1539 = sbr.rel (%p1537) target = $region32
        $region31: #{tpu_custom_call.1} parent=27 // pred_region
          %s1540 = smul.u32 4, %s16
          %1542 = vsyncadd %s1533, 0
          %s1543 = smul.addr %s1540, 2
          %s1544 = smul.addr %s1543, 8
          %s1545 = scalar_lea.hbm %s2, %s1544
          %s1546 = sshll.u32 %s1536, 4
          %s1547 = int_to_ptr.vmem [resolvable:$true] %s1546
          %s1548 = sshll.u32 %s1545, 4
          %s1549 = int_to_ptr.hbm [resolvable:$true] %s1548
          %1554 = dma.vmem_to_hbm [thread:$0]  %s1547, 1024, %s1549, %s1533, 128, 128, 8
        $region32: #{tpu_custom_call.1} parent=27 // pred_fallthru
          _
      $region28: #{tpu_custom_call.1} parent=5 // pred_fallthru
        _
      %p1555 = scmp.le.s32.totalorder 2, %s11
      // Predicated region
      $region33: #{tpu_custom_call.1} parent=5 // pred_check
        %p1556 = pneg %p1555
      $region34: #{tpu_custom_call.1} parent=5 // pred_check_branch
        %1558 = sbr.rel (%p1556) target = $region36
      $region35: #{tpu_custom_call.1} parent=5 // pred_region
        %s1559 = ssub.s32 %s11, 2
        // Predicated region
        $region37: #{tpu_custom_call.1} parent=35 // pred_check
          %p1560 = pneg %p92
        $region38: #{tpu_custom_call.1} parent=35 // pred_check_branch
          %1562 = sbr.rel (%p1560) target = $region40
        $region39: #{tpu_custom_call.1} parent=35 // pred_region
          %s1563 = sand.u32 %s77, 1
          %s1564 = scalar_lea.sflag [#allocation3], %s1563
          %s1565 = sand.u32 %s77, 1
          %s1566 = smul.addr %s1565, 64
          %s1567 = scalar_lea.vmem [#allocation2], %s1566
          %1569 = dma.done %s1564, 1024
        $region40: #{tpu_custom_call.1} parent=35 // pred_fallthru
          _
      $region36: #{tpu_custom_call.1} parent=5 // pred_fallthru
        _
    $region6: #{tpu_custom_call.1} parent=1 // loop_footer
      %s15 = sadd.s32 1, %s11
    $region7: #{tpu_custom_call.1} parent=1 // loop_footer_branch
      %10 = sbr.rel target = $region3
    $region8: #{tpu_custom_call.1} parent=1 // loop_exit
      _
    %1570 = vsyncpa [#allocation3], 1
    %s1571 = scalar_lea.sflag [#allocation3], 1
    %1572 = vsyncpa %s1571, 1

</llo_original>
